<compile_context>
chip_gen: v7x
topology: tpu7x:2x2x1
jax: 0.10.0
libtpu: 0.0.40
codegen_flags: <defaults>
</compile_context>

<pallas_src>
import jax
import jax.numpy as jnp
from jax.experimental import pallas as pl
from jax.experimental.pallas import tpu as pltpu

hidden_size = 5
input_feature_size = 4
num_layers = 2   # fc2 output dim (as in the reference module)

GROUP = 64       # batch rows packed per lane-dense row: 64*4=256 in-lanes, 64*2=128 out-lanes
MIN_TILE_G = 8   # sublane granularity for the (group-rows, lanes) blocks


def _round_up(n, m):
    return ((n + m - 1) // m) * m


def mlp_kernel(x_ref, w1_ref, b1_ref, w2_ref, b2_ref, o_ref):
    # x_ref: (tile_g, 256) lane-dense block of packed batch rows.
    x = x_ref[...]
    h = jnp.dot(x, w1_ref[...], preferred_element_type=jnp.float32) + b1_ref[...]
    h = jnp.maximum(h, 0.0)                                     # ReLU (VPU)
    out = jnp.dot(h, w2_ref[...], preferred_element_type=jnp.float32) + b2_ref[...]
    o_ref[...] = out.astype(o_ref.dtype)


def net_forward(x, w1, b1, w2, b2, *, max_tile_groups=1024):
    """Forward pass matching the PyTorch module.

    x:  (B, in_features)
    w1: (hidden, in)   -- torch nn.Linear weight layout
    b1: (hidden,)
    w2: (out, hidden)
    b2: (out,)
    returns (B, out) == fc2(relu(fc1(x)))
    """
    B, in_f = x.shape
    hid_f = w1.shape[0]
    out_f = w2.shape[0]

    # ---- tile / padding selection (group units: 1 group row = GROUP batch rows) ----
    max_tile_groups = max(MIN_TILE_G, _round_up(int(max_tile_groups), MIN_TILE_G))
    n_groups = -(-B // GROUP)
    g_aligned = _round_up(n_groups, MIN_TILE_G)
    n_steps = max(1, -(-g_aligned // max_tile_groups))
    if g_aligned >= 2 * MIN_TILE_G:
        n_steps = max(n_steps, 2)          # >=2 grid steps so both v7x TCs get work
    tile_g = _round_up(-(-g_aligned // n_steps), MIN_TILE_G)
    g_pad = tile_g * n_steps
    b_pad = g_pad * GROUP

    # ---- free-reshape packing (only pads when B is not already aligned) ----
    if b_pad != B:
        x = jnp.pad(x, ((0, b_pad - B), (0, 0)))
    x_rs = x.reshape(g_pad, GROUP * in_f)                        # free (contiguous rows)

    # ---- block-diagonal weights (built once; tiny: ~0.5 MiB total) ----
    eye = jnp.eye(GROUP, dtype=x.dtype)
    w1bd = jnp.kron(eye, w1.T.astype(x.dtype))                   # (GROUP*in, GROUP*hid)
    w2bd = jnp.kron(eye, w2.T.astype(x.dtype))                   # (GROUP*hid, GROUP*out)
    b1t = jnp.tile(b1.astype(jnp.float32), GROUP).reshape(1, GROUP * hid_f)
    b2t = jnp.tile(b2.astype(jnp.float32), GROUP).reshape(1, GROUP * out_f)

    grid = (n_steps,)

    out_rs = pl.pallas_call(
        mlp_kernel,
        out_shape=jax.ShapeDtypeStruct((g_pad, GROUP * out_f), x.dtype),
        grid_spec=pltpu.PrefetchScalarGridSpec(
            num_scalar_prefetch=0,
            grid=grid,
            in_specs=[
                # packed x streams through the pipeline, lane-dense tiles
                pl.BlockSpec((tile_g, GROUP * in_f), lambda i: (i, 0)),
                # weights / biases: same block every step -> stay resident in VMEM
                pl.BlockSpec((GROUP * in_f, GROUP * hid_f), lambda i: (0, 0)),
                pl.BlockSpec((1, GROUP * hid_f), lambda i: (0, 0)),
                pl.BlockSpec((GROUP * hid_f, GROUP * out_f), lambda i: (0, 0)),
                pl.BlockSpec((1, GROUP * out_f), lambda i: (0, 0)),
            ],
            out_specs=pl.BlockSpec((tile_g, GROUP * out_f), lambda i: (i, 0)),
        ),
        compiler_params=pltpu.CompilerParams(
            # Independent batch tiles: shard across v7x's two TensorCores.
            dimension_semantics=("parallel",),
        ),
    )(x_rs, w1bd, b1t, w2bd, b2t)

    # Unpack back to (B, out): free reshape + (at most tiny) slice.
    out = out_rs.reshape(b_pad, out_f)
    return out[:B]


def _init_params(key):
    """Deterministic parameter init mirroring nn.Linear shapes."""
    k1, k2, k3, k4 = jax.random.split(key, 4)
    # torch.nn.Linear weight shape: (out_features, in_features)
    w1 = jax.random.uniform(k1, (hidden_size, input_feature_size),
                            jnp.float32, -0.5, 0.5)
    b1 = jax.random.uniform(k2, (hidden_size,), jnp.float32, -0.5, 0.5)
    w2 = jax.random.uniform(k3, (num_layers, hidden_size),
                            jnp.float32, -0.5, 0.5)
    b2 = jax.random.uniform(k4, (num_layers,), jnp.float32, -0.5, 0.5)
    return w1, b1, w2, b2


def _reference(x, w1, b1, w2, b2):
    return jnp.maximum(x @ w1.T + b1, 0.0) @ w2.T + b2


if __name__ == "__main__":
    key = jax.random.PRNGKey(0)
    k_x1, k_x2, k_x3, k_p = jax.random.split(key, 4)
    w1, b1, w2, b2 = _init_params(k_p)

    fwd = jax.jit(net_forward)

    # Case 1: tiny batch (single grid step, padded to one 512-row group tile).
    batch = 8
    x = jax.random.normal(k_x1, (batch, input_feature_size), jnp.float32)
    out = jax.block_until_ready(fwd(x, w1, b1, w2, b2))
    ref = _reference(x, w1, b1, w2, b2)
    assert out.shape == (batch, num_layers)
    assert jnp.allclose(out, ref, atol=1e-5, rtol=1e-5)

    # Case 2: batch not a multiple of the 64-row pack -> exercises padding path.
    batch2 = 300
    x2 = jax.random.normal(k_x2, (batch2, input_feature_size), jnp.float32)
    out2 = jax.block_until_ready(fwd(x2, w1, b1, w2, b2))
    ref2 = _reference(x2, w1, b1, w2, b2)
    assert out2.shape == (batch2, num_layers)
    assert jnp.allclose(out2, ref2, atol=1e-5, rtol=1e-5)

    # Case 3: aligned batch -> no padding, 2 pipelined grid steps ("parallel" axis).
    batch3 = 1024
    x3 = jax.random.normal(k_x3, (batch3, input_feature_size), jnp.float32)
    out3 = jax.block_until_ready(fwd(x3, w1, b1, w2, b2))
    ref3 = _reference(x3, w1, b1, w2, b2)
    assert out3.shape == (batch3, num_layers)
    assert jnp.allclose(out3, ref3, atol=1e-5, rtol=1e-5)

    print("KERNEL_OK")
</pallas_src>

<mosaic_0001>
module attributes {stable_mosaic.version = 11 : i64} {
  func.func @mlp_kernel(%arg0: i32, %arg1: memref<8x256xf32, #tpu.memory_space<vmem>>, %arg2: memref<256x320xf32, #tpu.memory_space<vmem>>, %arg3: memref<1x320xf32, #tpu.memory_space<vmem>>, %arg4: memref<320x128xf32, #tpu.memory_space<vmem>>, %arg5: memref<1x128xf32, #tpu.memory_space<vmem>>, %arg6: memref<8x128xf32, #tpu.memory_space<vmem>>) attributes {dimension_semantics = [#tpu.dimension_semantics<parallel>], iteration_bounds = array<i64: 1>, scalar_prefetch = 0 : i64, scratch_operands = 0 : i64, tpu.core_type = #tpu.core_type<tc>, window_params = [{transform_indices = @transform_0, window_bounds = array<i64: 8, 256>}, {pipeline_mode = #tpu.pipeline_mode<synchronous>, transform_indices = @transform_1, window_bounds = array<i64: 256, 320>}, {pipeline_mode = #tpu.pipeline_mode<synchronous>, transform_indices = @transform_2, window_bounds = array<i64: 1, 320>}, {pipeline_mode = #tpu.pipeline_mode<synchronous>, transform_indices = @transform_3, window_bounds = array<i64: 320, 128>}, {pipeline_mode = #tpu.pipeline_mode<synchronous>, transform_indices = @transform_4, window_bounds = array<i64: 1, 128>}, {transform_indices = @transform_5, window_bounds = array<i64: 8, 128>}]} {
    %c0 = arith.constant 0 : index
    %c0_0 = arith.constant 0 : index
    %0 = vector.load %arg1[%c0, %c0_0] : memref<8x256xf32, #tpu.memory_space<vmem>>, vector<8x256xf32>
    %c0_1 = arith.constant 0 : index
    %c0_2 = arith.constant 0 : index
    %1 = vector.load %arg2[%c0_1, %c0_2] : memref<256x320xf32, #tpu.memory_space<vmem>>, vector<256x320xf32>
    %cst = arith.constant dense<0.000000e+00> : vector<8x320xf32>
    %2 = tpu.matmul %0, %1, %cst {dimension_numbers = #tpu.dot_dimension_numbers<[1], [0], [0], [1], [0, 0, 1, 1], [], []>} : vector<8x256xf32>, vector<256x320xf32>, vector<8x320xf32> -> vector<8x320xf32>
    %c0_3 = arith.constant 0 : index
    %c0_4 = arith.constant 0 : index
    %3 = vector.load %arg3[%c0_3, %c0_4] : memref<1x320xf32, #tpu.memory_space<vmem>>, vector<1x320xf32>
    %4 = vector.broadcast %3 : vector<1x320xf32> to vector<8x320xf32>
    %5 = arith.addf %2, %4 : vector<8x320xf32>
    %cst_5 = arith.constant 0.000000e+00 : f32
    %6 = vector.broadcast %cst_5 : f32 to vector<8x320xf32>
    %7 = arith.maximumf %5, %6 : vector<8x320xf32>
    %c0_6 = arith.constant 0 : index
    %c0_7 = arith.constant 0 : index
    %8 = vector.load %arg4[%c0_6, %c0_7] : memref<320x128xf32, #tpu.memory_space<vmem>>, vector<320x128xf32>
    %cst_8 = arith.constant dense<0.000000e+00> : vector<8x128xf32>
    %9 = tpu.matmul %7, %8, %cst_8 {dimension_numbers = #tpu.dot_dimension_numbers<[1], [0], [0], [1], [0, 0, 1, 1], [], []>} : vector<8x320xf32>, vector<320x128xf32>, vector<8x128xf32> -> vector<8x128xf32>
    %c0_9 = arith.constant 0 : index
    %c0_10 = arith.constant 0 : index
    %10 = vector.load %arg5[%c0_9, %c0_10] : memref<1x128xf32, #tpu.memory_space<vmem>>, vector<1x128xf32>
    %11 = vector.broadcast %10 : vector<1x128xf32> to vector<8x128xf32>
    %12 = arith.addf %9, %11 : vector<8x128xf32>
    %c0_11 = arith.constant 0 : index
    %c0_12 = arith.constant 0 : index
    %13 = vector.load %arg6[%c0_11, %c0_12] : memref<8x128xf32, #tpu.memory_space<vmem>>, vector<8x128xf32>
    tpu.vector_store %arg6[%c0_11, %c0_12], %12 {strides = array<i32>} : memref<8x128xf32, #tpu.memory_space<vmem>>, vector<8x128xf32>,
    return
  }
  func.func @transform_0(%arg0: i32) -> (i32, i32) {
    %c0_i32 = arith.constant 0 : i32
    %c0_i32_0 = arith.constant 0 : i32
    return %arg0, %c0_i32 : i32, i32
  }
  func.func @transform_1(%arg0: i32) -> (i32, i32) {
    %c0_i32 = arith.constant 0 : i32
    %c0_i32_0 = arith.constant 0 : i32
    %c0_i32_1 = arith.constant 0 : i32
    return %c0_i32, %c0_i32_0 : i32, i32
  }
  func.func @transform_2(%arg0: i32) -> (i32, i32) {
    %c0_i32 = arith.constant 0 : i32
    %c0_i32_0 = arith.constant 0 : i32
    %c0_i32_1 = arith.constant 0 : i32
    return %c0_i32, %c0_i32_0 : i32, i32
  }
  func.func @transform_3(%arg0: i32) -> (i32, i32) {
    %c0_i32 = arith.constant 0 : i32
    %c0_i32_0 = arith.constant 0 : i32
    %c0_i32_1 = arith.constant 0 : i32
    return %c0_i32, %c0_i32_0 : i32, i32
  }
  func.func @transform_4(%arg0: i32) -> (i32, i32) {
    %c0_i32 = arith.constant 0 : i32
    %c0_i32_0 = arith.constant 0 : i32
    %c0_i32_1 = arith.constant 0 : i32
    return %c0_i32, %c0_i32_0 : i32, i32
  }
  func.func @transform_5(%arg0: i32) -> (i32, i32) {
    %c0_i32 = arith.constant 0 : i32
    %c0_i32_0 = arith.constant 0 : i32
    return %arg0, %c0_i32 : i32, i32
  }
}

</mosaic_0001>

<llo_original>
// kernel: tile.13
$region0: #{tile.13}
  #allocation0 [shape = 's32[1]{0}', space=sflag, size = 0x4, scoped, tag = 'scoped memory for tile.13']
  %s0 = inlined_call_operand.vmem [shape: f32[5], index: 0, kind: input, shape index: {}]
  %s1 = inlined_call_operand.vmem [shape: f32[64,5], index: 1, kind: output, shape index: {}]
  // Predicated region
  $region2: #{tile.13} parent=0 // pred_check
    _
  $region3: #{tile.13} parent=0 // pred_check_branch
    %3 = sbr.rel (0) target = $region5
  $region4: #{tile.13} parent=0 // pred_region
    _
  $region5: #{tile.13} parent=0 // pred_fallthru
    _
  %v4 = vld [vmem:[%s0] ss:$0 sm:$0xff]
  %5 = vst [vmem:[%s1] sm:$0xff] %v4
  %s6 = scalar_lea.vmem %s1, 8
  %7 = vst [vmem:[%s6] sm:$0xff] %v4
  %s8 = scalar_lea.vmem %s1, 16
  %9 = vst [vmem:[%s8] sm:$0xff] %v4
  %s10 = scalar_lea.vmem %s1, 24
  %11 = vst [vmem:[%s10] sm:$0xff] %v4
  %s12 = scalar_lea.vmem %s1, 32
  %13 = vst [vmem:[%s12] sm:$0xff] %v4
  %s14 = scalar_lea.vmem %s1, 40
  %15 = vst [vmem:[%s14] sm:$0xff] %v4
  %s16 = scalar_lea.vmem %s1, 48
  %17 = vst [vmem:[%s16] sm:$0xff] %v4
  %s18 = scalar_lea.vmem %s1, 56
  %19 = vst [vmem:[%s18] sm:$0xff] %v4

// kernel: tile.14
$region0: #{tile.14}
  %s0 = inlined_call_operand.vmem [shape: f32[64,5], index: 0, kind: input, shape index: {}]
  %s1 = inlined_call_operand.vmem [shape: f32[1,320], index: 1, kind: output, shape index: {}]
  $region1: #{tile.14} parent=0
    #allocation0 [shape = 'u8[12288]{0}', space=vmem, size = 0x3000, scoped, tag = 'scoped mem for output reshape']
    %v2 = vld [vmem:[%s0] sm:$0x1]
    %vm3 = vcmask 39936
    %4 = vst.msk [vmem:[#allocation0] sm:$0x1] %vm3, %v2
    %s5 = scalar_lea.vmem %s0, 51
    %v6 = vld [vmem:[%s5] sm:$0x1]
    %s7 = scalar_lea.vmem %s0, 51
    %v8 = vld [vmem:[%s7] sm:$0x1]
    %vm9 = vcmask 7168
    %v10 = vsel %vm9, %v8, %v6
    %11 = vrot.lane.b32.xlu0 %v10, 127
    %v12 = vpop.permute.xlu0 %11
    %vm13 = vcmask 31744
    %s14 = scalar_lea.vmem [#allocation0], 16
    %15 = vst.msk [vmem:[%s14] sm:$0x1] %vm13, %v12
    %vm16 = vcmask 1048568
    %s17 = scalar_lea.vmem [#allocation0], 8
    %18 = vst.msk [vmem:[%s17] sm:$0x1] %vm16, %v12
    %s19 = scalar_lea.vmem %s0, 25
    %v20 = vld [vmem:[%s19] sm:$0x1]
    %s21 = scalar_lea.vmem %s0, 25
    %v22 = vld [vmem:[%s21] sm:$0x1]
    %vm23 = vcmask 23552
    %v24 = vsel %vm23, %v22, %v20
    %25 = vrot.lane.b32.xlu0 %v24, 125
    %v26 = vpop.permute.xlu0 %25
    %vm27 = vcmask 15360
    %s28 = scalar_lea.vmem [#allocation0], 8
    %29 = vst.msk [vmem:[%s28] sm:$0x1] %vm27, %v26
    %vm30 = vcmask 1048552
    %31 = vst.msk [vmem:[#allocation0] sm:$0x1] %vm30, %v26
    %s32 = scalar_lea.vmem %s0, 50
    %v33 = vld [vmem:[%s32] sm:$0x1]
    %34 = vrot.lane.b32.xlu0 %v33, 122
    %v35 = vpop.permute.xlu0 %34
    %vm36 = vcmask 1040336
    %s37 = scalar_lea.vmem [#allocation0], 8
    %38 = vst.msk [vmem:[%s37] sm:$0x1] %vm36, %v35
    %s39 = scalar_lea.vmem %s0, 24
    %v40 = vld [vmem:[%s39] sm:$0x1]
    %41 = vrot.lane.b32.xlu0 %v40, 120
    %v42 = vpop.permute.xlu0 %41
    %vm43 = vcmask 1023936
    %44 = vst.msk [vmem:[#allocation0] sm:$0x1] %vm43, %v42
    %s45 = scalar_lea.vmem %s0, 49
    %v46 = vld [vmem:[%s45] sm:$0x1]
    %47 = vrot.lane.b32.xlu0 %v46, 117
    %v48 = vpop.permute.xlu0 %47
    %vm49 = vcmask 999336
    %s50 = scalar_lea.vmem [#allocation0], 8
    %51 = vst.msk [vmem:[%s50] sm:$0x1] %vm49, %v48
    %s52 = scalar_lea.vmem %s0, 23
    %v53 = vld [vmem:[%s52] sm:$0x1]
    %54 = vrot.lane.b32.xlu0 %v53, 115
    %v55 = vpop.permute.xlu0 %54
    %vm56 = vcmask 982936
    %57 = vst.msk [vmem:[#allocation0] sm:$0x1] %vm56, %v55
    %s58 = scalar_lea.vmem %s0, 48
    %v59 = vld [vmem:[%s58] sm:$0x1]
    %60 = vrot.lane.b32.xlu0 %v59, 112
    %v61 = vpop.permute.xlu0 %60
    %vm62 = vcmask 958336
    %s63 = scalar_lea.vmem [#allocation0], 8
    %64 = vst.msk [vmem:[%s63] sm:$0x1] %vm62, %v61
    %s65 = scalar_lea.vmem %s0, 22
    %v66 = vld [vmem:[%s65] sm:$0x1]
    %67 = vrot.lane.b32.xlu0 %v66, 110
    %v68 = vpop.permute.xlu0 %67
    %vm69 = vcmask 941936
    %70 = vst.msk [vmem:[#allocation0] sm:$0x1] %vm69, %v68
    %s71 = scalar_lea.vmem %s0, 47
    %v72 = vld [vmem:[%s71] sm:$0x1]
    %73 = vrot.lane.b32.xlu0 %v72, 107
    %v74 = vpop.permute.xlu0 %73
    %vm75 = vcmask 917336
    %s76 = scalar_lea.vmem [#allocation0], 8
    %77 = vst.msk [vmem:[%s76] sm:$0x1] %vm75, %v74
    %s78 = scalar_lea.vmem %s0, 21
    %v79 = vld [vmem:[%s78] sm:$0x1]
    %80 = vrot.lane.b32.xlu0 %v79, 105
    %v81 = vpop.permute.xlu0 %80
    %vm82 = vcmask 900936
    %83 = vst.msk [vmem:[#allocation0] sm:$0x1] %vm82, %v81
    %s84 = scalar_lea.vmem %s0, 46
    %v85 = vld [vmem:[%s84] sm:$0x1]
    %86 = vrot.lane.b32.xlu0 %v85, 102
    %v87 = vpop.permute.xlu0 %86
    %vm88 = vcmask 876336
    %s89 = scalar_lea.vmem [#allocation0], 8
    %90 = vst.msk [vmem:[%s89] sm:$0x1] %vm88, %v87
    %s91 = scalar_lea.vmem %s0, 20
    %v92 = vld [vmem:[%s91] sm:$0x1]
    %93 = vrot.lane.b32.xlu0 %v92, 100
    %v94 = vpop.permute.xlu0 %93
    %vm95 = vcmask 859936
    %96 = vst.msk [vmem:[#allocation0] sm:$0x1] %vm95, %v94
    %s97 = scalar_lea.vmem %s0, 45
    %v98 = vld [vmem:[%s97] sm:$0x1]
    %99 = vrot.lane.b32.xlu0 %v98, 97
    %v100 = vpop.permute.xlu0 %99
    %vm101 = vcmask 835336
    %s102 = scalar_lea.vmem [#allocation0], 8
    %103 = vst.msk [vmem:[%s102] sm:$0x1] %vm101, %v100
    %s104 = scalar_lea.vmem %s0, 19
    %v105 = vld [vmem:[%s104] sm:$0x1]
    %106 = vrot.lane.b32.xlu0 %v105, 95
    %v107 = vpop.permute.xlu0 %106
    %vm108 = vcmask 818936
    %109 = vst.msk [vmem:[#allocation0] sm:$0x1] %vm108, %v107
    %s110 = scalar_lea.vmem %s0, 44
    %v111 = vld [vmem:[%s110] sm:$0x1]
    %112 = vrot.lane.b32.xlu0 %v111, 92
    %v113 = vpop.permute.xlu0 %112
    %vm114 = vcmask 794336
    %s115 = scalar_lea.vmem [#allocation0], 8
    %116 = vst.msk [vmem:[%s115] sm:$0x1] %vm114, %v113
    %s117 = scalar_lea.vmem %s0, 18
    %v118 = vld [vmem:[%s117] sm:$0x1]
    %119 = vrot.lane.b32.xlu0 %v118, 90
    %v120 = vpop.permute.xlu0 %119
    %vm121 = vcmask 777936
    %122 = vst.msk [vmem:[#allocation0] sm:$0x1] %vm121, %v120
    %s123 = scalar_lea.vmem %s0, 43
    %v124 = vld [vmem:[%s123] sm:$0x1]
    %125 = vrot.lane.b32.xlu0 %v124, 87
    %v126 = vpop.permute.xlu0 %125
    %vm127 = vcmask 753336
    %s128 = scalar_lea.vmem [#allocation0], 8
    %129 = vst.msk [vmem:[%s128] sm:$0x1] %vm127, %v126
    %s130 = scalar_lea.vmem %s0, 17
    %v131 = vld [vmem:[%s130] sm:$0x1]
    %132 = vrot.lane.b32.xlu0 %v131, 85
    %v133 = vpop.permute.xlu0 %132
    %vm134 = vcmask 736936
    %135 = vst.msk [vmem:[#allocation0] sm:$0x1] %vm134, %v133
    %s136 = scalar_lea.vmem %s0, 42
    %v137 = vld [vmem:[%s136] sm:$0x1]
    %138 = vrot.lane.b32.xlu0 %v137, 82
    %v139 = vpop.permute.xlu0 %138
    %vm140 = vcmask 712336
    %s141 = scalar_lea.vmem [#allocation0], 8
    %142 = vst.msk [vmem:[%s141] sm:$0x1] %vm140, %v139
    %s143 = scalar_lea.vmem %s0, 16
    %v144 = vld [vmem:[%s143] sm:$0x1]
    %145 = vrot.lane.b32.xlu0 %v144, 80
    %v146 = vpop.permute.xlu0 %145
    %vm147 = vcmask 695936
    %148 = vst.msk [vmem:[#allocation0] sm:$0x1] %vm147, %v146
    %s149 = scalar_lea.vmem %s0, 41
    %v150 = vld [vmem:[%s149] sm:$0x1]
    %151 = vrot.lane.b32.xlu0 %v150, 77
    %v152 = vpop.permute.xlu0 %151
    %vm153 = vcmask 671336
    %s154 = scalar_lea.vmem [#allocation0], 8
    %155 = vst.msk [vmem:[%s154] sm:$0x1] %vm153, %v152
    %s156 = scalar_lea.vmem %s0, 15
    %v157 = vld [vmem:[%s156] sm:$0x1]
    %158 = vrot.lane.b32.xlu0 %v157, 75
    %v159 = vpop.permute.xlu0 %158
    %vm160 = vcmask 654936
    %161 = vst.msk [vmem:[#allocation0] sm:$0x1] %vm160, %v159
    %s162 = scalar_lea.vmem %s0, 40
    %v163 = vld [vmem:[%s162] sm:$0x1]
    %164 = vrot.lane.b32.xlu0 %v163, 72
    %v165 = vpop.permute.xlu0 %164
    %vm166 = vcmask 630336
    %s167 = scalar_lea.vmem [#allocation0], 8
    %168 = vst.msk [vmem:[%s167] sm:$0x1] %vm166, %v165
    %s169 = scalar_lea.vmem %s0, 14
    %v170 = vld [vmem:[%s169] sm:$0x1]
    %171 = vrot.lane.b32.xlu0 %v170, 70
    %v172 = vpop.permute.xlu0 %171
    %vm173 = vcmask 613936
    %174 = vst.msk [vmem:[#allocation0] sm:$0x1] %vm173, %v172
    %s175 = scalar_lea.vmem %s0, 39
    %v176 = vld [vmem:[%s175] sm:$0x1]
    %177 = vrot.lane.b32.xlu0 %v176, 67
    %v178 = vpop.permute.xlu0 %177
    %vm179 = vcmask 589336
    %s180 = scalar_lea.vmem [#allocation0], 8
    %181 = vst.msk [vmem:[%s180] sm:$0x1] %vm179, %v178
    %s182 = scalar_lea.vmem %s0, 13
    %v183 = vld [vmem:[%s182] sm:$0x1]
    %184 = vrot.lane.b32.xlu0 %v183, 65
    %v185 = vpop.permute.xlu0 %184
    %vm186 = vcmask 572936
    %187 = vst.msk [vmem:[#allocation0] sm:$0x1] %vm186, %v185
    %s188 = scalar_lea.vmem %s0, 38
    %v189 = vld [vmem:[%s188] sm:$0x1]
    %190 = vrot.lane.b32.xlu0 %v189, 62
    %v191 = vpop.permute.xlu0 %190
    %vm192 = vcmask 548336
    %s193 = scalar_lea.vmem [#allocation0], 8
    %194 = vst.msk [vmem:[%s193] sm:$0x1] %vm192, %v191
    %s195 = scalar_lea.vmem %s0, 12
    %v196 = vld [vmem:[%s195] sm:$0x1]
    %197 = vrot.lane.b32.xlu0 %v196, 60
    %v198 = vpop.permute.xlu0 %197
    %vm199 = vcmask 531936
    %200 = vst.msk [vmem:[#allocation0] sm:$0x1] %vm199, %v198
    %s201 = scalar_lea.vmem %s0, 63
    %v202 = vld [vmem:[%s201] sm:$0x1]
    %203 = vrot.lane.b32.xlu0 %v202, 59
    %v204 = vpop.permute.xlu0 %203
    %vm205 = vcmask 523736
    %s206 = scalar_lea.vmem [#allocation0], 16
    %207 = vst.msk [vmem:[%s206] sm:$0x1] %vm205, %v204
    %s208 = scalar_lea.vmem %s0, 37
    %v209 = vld [vmem:[%s208] sm:$0x1]
    %210 = vrot.lane.b32.xlu0 %v209, 57
    %v211 = vpop.permute.xlu0 %210
    %vm212 = vcmask 507336
    %s213 = scalar_lea.vmem [#allocation0], 8
    %214 = vst.msk [vmem:[%s213] sm:$0x1] %vm212, %v211
    %s215 = scalar_lea.vmem %s0, 11
    %v216 = vld [vmem:[%s215] sm:$0x1]
    %217 = vrot.lane.b32.xlu0 %v216, 55
    %v218 = vpop.permute.xlu0 %217
    %vm219 = vcmask 490936
    %220 = vst.msk [vmem:[#allocation0] sm:$0x1] %vm219, %v218
    %s221 = scalar_lea.vmem %s0, 62
    %v222 = vld [vmem:[%s221] sm:$0x1]
    %223 = vrot.lane.b32.xlu0 %v222, 54
    %v224 = vpop.permute.xlu0 %223
    %vm225 = vcmask 482736
    %s226 = scalar_lea.vmem [#allocation0], 16
    %227 = vst.msk [vmem:[%s226] sm:$0x1] %vm225, %v224
    %s228 = scalar_lea.vmem %s0, 36
    %v229 = vld [vmem:[%s228] sm:$0x1]
    %230 = vrot.lane.b32.xlu0 %v229, 52
    %v231 = vpop.permute.xlu0 %230
    %vm232 = vcmask 466336
    %s233 = scalar_lea.vmem [#allocation0], 8
    %234 = vst.msk [vmem:[%s233] sm:$0x1] %vm232, %v231
    %s235 = scalar_lea.vmem %s0, 10
    %v236 = vld [vmem:[%s235] sm:$0x1]
    %237 = vrot.lane.b32.xlu0 %v236, 50
    %v238 = vpop.permute.xlu0 %237
    %vm239 = vcmask 449936
    %240 = vst.msk [vmem:[#allocation0] sm:$0x1] %vm239, %v238
    %s241 = scalar_lea.vmem %s0, 61
    %v242 = vld [vmem:[%s241] sm:$0x1]
    %243 = vrot.lane.b32.xlu0 %v242, 49
    %v244 = vpop.permute.xlu0 %243
    %vm245 = vcmask 441736
    %s246 = scalar_lea.vmem [#allocation0], 16
    %247 = vst.msk [vmem:[%s246] sm:$0x1] %vm245, %v244
    %s248 = scalar_lea.vmem %s0, 35
    %v249 = vld [vmem:[%s248] sm:$0x1]
    %250 = vrot.lane.b32.xlu0 %v249, 47
    %v251 = vpop.permute.xlu0 %250
    %vm252 = vcmask 425336
    %s253 = scalar_lea.vmem [#allocation0], 8
    %254 = vst.msk [vmem:[%s253] sm:$0x1] %vm252, %v251
    %s255 = scalar_lea.vmem %s0, 9
    %v256 = vld [vmem:[%s255] sm:$0x1]
    %257 = vrot.lane.b32.xlu0 %v256, 45
    %v258 = vpop.permute.xlu0 %257
    %vm259 = vcmask 408936
    %260 = vst.msk [vmem:[#allocation0] sm:$0x1] %vm259, %v258
    %s261 = scalar_lea.vmem %s0, 60
    %v262 = vld [vmem:[%s261] sm:$0x1]
    %263 = vrot.lane.b32.xlu0 %v262, 44
    %v264 = vpop.permute.xlu0 %263
    %vm265 = vcmask 400736
    %s266 = scalar_lea.vmem [#allocation0], 16
    %267 = vst.msk [vmem:[%s266] sm:$0x1] %vm265, %v264
    %s268 = scalar_lea.vmem %s0, 34
    %v269 = vld [vmem:[%s268] sm:$0x1]
    %270 = vrot.lane.b32.xlu0 %v269, 42
    %v271 = vpop.permute.xlu0 %270
    %vm272 = vcmask 384336
    %s273 = scalar_lea.vmem [#allocation0], 8
    %274 = vst.msk [vmem:[%s273] sm:$0x1] %vm272, %v271
    %s275 = scalar_lea.vmem %s0, 8
    %v276 = vld [vmem:[%s275] sm:$0x1]
    %277 = vrot.lane.b32.xlu0 %v276, 40
    %v278 = vpop.permute.xlu0 %277
    %vm279 = vcmask 367936
    %280 = vst.msk [vmem:[#allocation0] sm:$0x1] %vm279, %v278
    %s281 = scalar_lea.vmem %s0, 59
    %v282 = vld [vmem:[%s281] sm:$0x1]
    %283 = vrot.lane.b32.xlu0 %v282, 39
    %v284 = vpop.permute.xlu0 %283
    %vm285 = vcmask 359736
    %s286 = scalar_lea.vmem [#allocation0], 16
    %287 = vst.msk [vmem:[%s286] sm:$0x1] %vm285, %v284
    %s288 = scalar_lea.vmem %s0, 33
    %v289 = vld [vmem:[%s288] sm:$0x1]
    %290 = vrot.lane.b32.xlu0 %v289, 37
    %v291 = vpop.permute.xlu0 %290
    %vm292 = vcmask 343336
    %s293 = scalar_lea.vmem [#allocation0], 8
    %294 = vst.msk [vmem:[%s293] sm:$0x1] %vm292, %v291
    %s295 = scalar_lea.vmem %s0, 7
    %v296 = vld [vmem:[%s295] sm:$0x1]
    %297 = vrot.lane.b32.xlu0 %v296, 35
    %v298 = vpop.permute.xlu0 %297
    %vm299 = vcmask 326936
    %300 = vst.msk [vmem:[#allocation0] sm:$0x1] %vm299, %v298
    %s301 = scalar_lea.vmem %s0, 58
    %v302 = vld [vmem:[%s301] sm:$0x1]
    %303 = vrot.lane.b32.xlu0 %v302, 34
    %v304 = vpop.permute.xlu0 %303
    %vm305 = vcmask 318736
    %s306 = scalar_lea.vmem [#allocation0], 16
    %307 = vst.msk [vmem:[%s306] sm:$0x1] %vm305, %v304
    %s308 = scalar_lea.vmem %s0, 32
    %v309 = vld [vmem:[%s308] sm:$0x1]
    %310 = vrot.lane.b32.xlu0 %v309, 32
    %v311 = vpop.permute.xlu0 %310
    %vm312 = vcmask 302336
    %s313 = scalar_lea.vmem [#allocation0], 8
    %314 = vst.msk [vmem:[%s313] sm:$0x1] %vm312, %v311
    %s315 = scalar_lea.vmem %s0, 6
    %v316 = vld [vmem:[%s315] sm:$0x1]
    %317 = vrot.lane.b32.xlu0 %v316, 30
    %v318 = vpop.permute.xlu0 %317
    %vm319 = vcmask 285936
    %320 = vst.msk [vmem:[#allocation0] sm:$0x1] %vm319, %v318
    %s321 = scalar_lea.vmem %s0, 57
    %v322 = vld [vmem:[%s321] sm:$0x1]
    %323 = vrot.lane.b32.xlu0 %v322, 29
    %v324 = vpop.permute.xlu0 %323
    %vm325 = vcmask 277736
    %s326 = scalar_lea.vmem [#allocation0], 16
    %327 = vst.msk [vmem:[%s326] sm:$0x1] %vm325, %v324
    %s328 = scalar_lea.vmem %s0, 31
    %v329 = vld [vmem:[%s328] sm:$0x1]
    %330 = vrot.lane.b32.xlu0 %v329, 27
    %v331 = vpop.permute.xlu0 %330
    %vm332 = vcmask 261336
    %s333 = scalar_lea.vmem [#allocation0], 8
    %334 = vst.msk [vmem:[%s333] sm:$0x1] %vm332, %v331
    %s335 = scalar_lea.vmem %s0, 5
    %v336 = vld [vmem:[%s335] sm:$0x1]
    %337 = vrot.lane.b32.xlu0 %v336, 25
    %v338 = vpop.permute.xlu0 %337
    %vm339 = vcmask 244936
    %340 = vst.msk [vmem:[#allocation0] sm:$0x1] %vm339, %v338
    %s341 = scalar_lea.vmem %s0, 56
    %v342 = vld [vmem:[%s341] sm:$0x1]
    %343 = vrot.lane.b32.xlu0 %v342, 24
    %v344 = vpop.permute.xlu0 %343
    %vm345 = vcmask 236736
    %s346 = scalar_lea.vmem [#allocation0], 16
    %347 = vst.msk [vmem:[%s346] sm:$0x1] %vm345, %v344
    %s348 = scalar_lea.vmem %s0, 30
    %v349 = vld [vmem:[%s348] sm:$0x1]
    %350 = vrot.lane.b32.xlu0 %v349, 22
    %v351 = vpop.permute.xlu0 %350
    %vm352 = vcmask 220336
    %s353 = scalar_lea.vmem [#allocation0], 8
    %354 = vst.msk [vmem:[%s353] sm:$0x1] %vm352, %v351
    %s355 = scalar_lea.vmem %s0, 4
    %v356 = vld [vmem:[%s355] sm:$0x1]
    %357 = vrot.lane.b32.xlu0 %v356, 20
    %v358 = vpop.permute.xlu0 %357
    %vm359 = vcmask 203936
    %360 = vst.msk [vmem:[#allocation0] sm:$0x1] %vm359, %v358
    %s361 = scalar_lea.vmem %s0, 55
    %v362 = vld [vmem:[%s361] sm:$0x1]
    %363 = vrot.lane.b32.xlu0 %v362, 19
    %v364 = vpop.permute.xlu0 %363
    %vm365 = vcmask 195736
    %s366 = scalar_lea.vmem [#allocation0], 16
    %367 = vst.msk [vmem:[%s366] sm:$0x1] %vm365, %v364
    %s368 = scalar_lea.vmem %s0, 29
    %v369 = vld [vmem:[%s368] sm:$0x1]
    %370 = vrot.lane.b32.xlu0 %v369, 17
    %v371 = vpop.permute.xlu0 %370
    %vm372 = vcmask 179336
    %s373 = scalar_lea.vmem [#allocation0], 8
    %374 = vst.msk [vmem:[%s373] sm:$0x1] %vm372, %v371
    %s375 = scalar_lea.vmem %s0, 3
    %v376 = vld [vmem:[%s375] sm:$0x1]
    %377 = vrot.lane.b32.xlu0 %v376, 15
    %v378 = vpop.permute.xlu0 %377
    %vm379 = vcmask 162936
    %380 = vst.msk [vmem:[#allocation0] sm:$0x1] %vm379, %v378
    %s381 = scalar_lea.vmem %s0, 54
    %v382 = vld [vmem:[%s381] sm:$0x1]
    %383 = vrot.lane.b32.xlu0 %v382, 14
    %v384 = vpop.permute.xlu0 %383
    %vm385 = vcmask 154736
    %s386 = scalar_lea.vmem [#allocation0], 16
    %387 = vst.msk [vmem:[%s386] sm:$0x1] %vm385, %v384
    %s388 = scalar_lea.vmem %s0, 28
    %v389 = vld [vmem:[%s388] sm:$0x1]
    %390 = vrot.lane.b32.xlu0 %v389, 12
    %v391 = vpop.permute.xlu0 %390
    %vm392 = vcmask 138336
    %s393 = scalar_lea.vmem [#allocation0], 8
    %394 = vst.msk [vmem:[%s393] sm:$0x1] %vm392, %v391
    %s395 = scalar_lea.vmem %s0, 2
    %v396 = vld [vmem:[%s395] sm:$0x1]
    %397 = vrot.lane.b32.xlu0 %v396, 10
    %v398 = vpop.permute.xlu0 %397
    %vm399 = vcmask 121936
    %400 = vst.msk [vmem:[#allocation0] sm:$0x1] %vm399, %v398
    %s401 = scalar_lea.vmem %s0, 53
    %v402 = vld [vmem:[%s401] sm:$0x1]
    %403 = vrot.lane.b32.xlu0 %v402, 9
    %v404 = vpop.permute.xlu0 %403
    %vm405 = vcmask 113736
    %s406 = scalar_lea.vmem [#allocation0], 16
    %407 = vst.msk [vmem:[%s406] sm:$0x1] %vm405, %v404
    %s408 = scalar_lea.vmem %s0, 27
    %v409 = vld [vmem:[%s408] sm:$0x1]
    %410 = vrot.lane.b32.xlu0 %v409, 7
    %v411 = vpop.permute.xlu0 %410
    %vm412 = vcmask 97336
    %s413 = scalar_lea.vmem [#allocation0], 8
    %414 = vst.msk [vmem:[%s413] sm:$0x1] %vm412, %v411
    %s415 = scalar_lea.vmem %s0, 1
    %v416 = vld [vmem:[%s415] sm:$0x1]
    %417 = vrot.lane.b32.xlu0 %v416, 5
    %v418 = vpop.permute.xlu0 %417
    %vm419 = vcmask 80936
    %420 = vst.msk [vmem:[#allocation0] sm:$0x1] %vm419, %v418
    %s421 = scalar_lea.vmem %s0, 52
    %v422 = vld [vmem:[%s421] sm:$0x1]
    %423 = vrot.lane.b32.xlu0 %v422, 4
    %v424 = vpop.permute.xlu0 %423
    %vm425 = vcmask 72736
    %s426 = scalar_lea.vmem [#allocation0], 16
    %427 = vst.msk [vmem:[%s426] sm:$0x1] %vm425, %v424
    %s428 = scalar_lea.vmem %s0, 26
    %v429 = vld [vmem:[%s428] sm:$0x1]
    %430 = vrot.lane.b32.xlu0 %v429, 2
    %v431 = vpop.permute.xlu0 %430
    %vm432 = vcmask 56336
    %s433 = scalar_lea.vmem [#allocation0], 8
    %434 = vst.msk [vmem:[%s433] sm:$0x1] %vm432, %v431
    %s436 = sshllo.u32 0, 1
    %v438 = vld [vmem:[#allocation0] sm:%s436]
    %s439 = sshllo.u32 0, 1
    %440 = vst [vmem:[%s1] sm:%s439] %v438
    %s441 = scalar_lea.vmem [#allocation0], 8
    %v442 = vld [vmem:[%s441] sm:%s436]
    %s443 = sshllo.u32 0, 1
    %s444 = scalar_lea.vmem %s1, 1
    %445 = vst [vmem:[%s444] sm:%s443] %v442
    %s446 = scalar_lea.vmem [#allocation0], 16
    %v447 = vld [vmem:[%s446] sm:%s436]
    %s448 = sshllo.u32 0, 1
    %s449 = smul.addr 1, 2
    %s450 = scalar_lea.vmem %s1, %s449
    %451 = vst [vmem:[%s450] sm:%s448] %v447

// kernel: tile.18
$region0: #{tile.18}
  #allocation0 [shape = 's32[1]{0}', space=sflag, size = 0x4, scoped, tag = 'scoped memory for tile.18']
  %s0 = inlined_call_operand.vmem [shape: f32[2], index: 0, kind: input, shape index: {}]
  %s1 = inlined_call_operand.vmem [shape: f32[64,2], index: 1, kind: output, shape index: {}]
  // Predicated region
  $region2: #{tile.18} parent=0 // pred_check
    _
  $region3: #{tile.18} parent=0 // pred_check_branch
    %3 = sbr.rel (0) target = $region5
  $region4: #{tile.18} parent=0 // pred_region
    _
  $region5: #{tile.18} parent=0 // pred_fallthru
    _
  %v4 = vld [vmem:[%s0] ss:$0 sm:$0xff]
  %5 = vst [vmem:[%s1] sm:$0xff] %v4
  %s6 = scalar_lea.vmem %s1, 8
  %7 = vst [vmem:[%s6] sm:$0xff] %v4
  %s8 = scalar_lea.vmem %s1, 16
  %9 = vst [vmem:[%s8] sm:$0xff] %v4
  %s10 = scalar_lea.vmem %s1, 24
  %11 = vst [vmem:[%s10] sm:$0xff] %v4
  %s12 = scalar_lea.vmem %s1, 32
  %13 = vst [vmem:[%s12] sm:$0xff] %v4
  %s14 = scalar_lea.vmem %s1, 40
  %15 = vst [vmem:[%s14] sm:$0xff] %v4
  %s16 = scalar_lea.vmem %s1, 48
  %17 = vst [vmem:[%s16] sm:$0xff] %v4
  %s18 = scalar_lea.vmem %s1, 56
  %19 = vst [vmem:[%s18] sm:$0xff] %v4

// kernel: tile.19
$region0: #{tile.19}
  %s0 = inlined_call_operand.vmem [shape: f32[64,2], index: 0, kind: input, shape index: {}]
  %s1 = inlined_call_operand.vmem [shape: f32[1,128], index: 1, kind: output, shape index: {}]
  $region1: #{tile.19} parent=0
    #allocation0 [shape = 'u8[4096]{0}', space=vmem, size = 0x1000, scoped, tag = 'scoped mem for output reshape']
    %v2 = vld [vmem:[%s0] sm:$0x1]
    %vm3 = vcmask 15360
    %4 = vst.msk [vmem:[#allocation0] sm:$0x1] %vm3, %v2
    %s5 = scalar_lea.vmem %s0, 63
    %v6 = vld [vmem:[%s5] sm:$0x1]
    %7 = vrot.lane.b32.xlu0 %v6, 126
    %v8 = vpop.permute.xlu0 %7
    %vm9 = vcmask 1048560
    %10 = vst.msk [vmem:[#allocation0] sm:$0x1] %vm9, %v8
    %s11 = scalar_lea.vmem %s0, 62
    %v12 = vld [vmem:[%s11] sm:$0x1]
    %13 = vrot.lane.b32.xlu0 %v12, 124
    %v14 = vpop.permute.xlu0 %13
    %vm15 = vcmask 1032160
    %16 = vst.msk [vmem:[#allocation0] sm:$0x1] %vm15, %v14
    %s17 = scalar_lea.vmem %s0, 61
    %v18 = vld [vmem:[%s17] sm:$0x1]
    %19 = vrot.lane.b32.xlu0 %v18, 122
    %v20 = vpop.permute.xlu0 %19
    %vm21 = vcmask 1015760
    %22 = vst.msk [vmem:[#allocation0] sm:$0x1] %vm21, %v20
    %s23 = scalar_lea.vmem %s0, 60
    %v24 = vld [vmem:[%s23] sm:$0x1]
    %25 = vrot.lane.b32.xlu0 %v24, 120
    %v26 = vpop.permute.xlu0 %25
    %vm27 = vcmask 999360
    %28 = vst.msk [vmem:[#allocation0] sm:$0x1] %vm27, %v26
    %s29 = scalar_lea.vmem %s0, 59
    %v30 = vld [vmem:[%s29] sm:$0x1]
    %31 = vrot.lane.b32.xlu0 %v30, 118
    %v32 = vpop.permute.xlu0 %31
    %vm33 = vcmask 982960
    %34 = vst.msk [vmem:[#allocation0] sm:$0x1] %vm33, %v32
    %s35 = scalar_lea.vmem %s0, 58
    %v36 = vld [vmem:[%s35] sm:$0x1]
    %37 = vrot.lane.b32.xlu0 %v36, 116
    %v38 = vpop.permute.xlu0 %37
    %vm39 = vcmask 966560
    %40 = vst.msk [vmem:[#allocation0] sm:$0x1] %vm39, %v38
    %s41 = scalar_lea.vmem %s0, 57
    %v42 = vld [vmem:[%s41] sm:$0x1]
    %43 = vrot.lane.b32.xlu0 %v42, 114
    %v44 = vpop.permute.xlu0 %43
    %vm45 = vcmask 950160
    %46 = vst.msk [vmem:[#allocation0] sm:$0x1] %vm45, %v44
    %s47 = scalar_lea.vmem %s0, 56
    %v48 = vld [vmem:[%s47] sm:$0x1]
    %49 = vrot.lane.b32.xlu0 %v48, 112
    %v50 = vpop.permute.xlu0 %49
    %vm51 = vcmask 933760
    %52 = vst.msk [vmem:[#allocation0] sm:$0x1] %vm51, %v50
    %s53 = scalar_lea.vmem %s0, 55
    %v54 = vld [vmem:[%s53] sm:$0x1]
    %55 = vrot.lane.b32.xlu0 %v54, 110
    %v56 = vpop.permute.xlu0 %55
    %vm57 = vcmask 917360
    %58 = vst.msk [vmem:[#allocation0] sm:$0x1] %vm57, %v56
    %s59 = scalar_lea.vmem %s0, 54
    %v60 = vld [vmem:[%s59] sm:$0x1]
    %61 = vrot.lane.b32.xlu0 %v60, 108
    %v62 = vpop.permute.xlu0 %61
    %vm63 = vcmask 900960
    %64 = vst.msk [vmem:[#allocation0] sm:$0x1] %vm63, %v62
    %s65 = scalar_lea.vmem %s0, 53
    %v66 = vld [vmem:[%s65] sm:$0x1]
    %67 = vrot.lane.b32.xlu0 %v66, 106
    %v68 = vpop.permute.xlu0 %67
    %vm69 = vcmask 884560
    %70 = vst.msk [vmem:[#allocation0] sm:$0x1] %vm69, %v68
    %s71 = scalar_lea.vmem %s0, 52
    %v72 = vld [vmem:[%s71] sm:$0x1]
    %73 = vrot.lane.b32.xlu0 %v72, 104
    %v74 = vpop.permute.xlu0 %73
    %vm75 = vcmask 868160
    %76 = vst.msk [vmem:[#allocation0] sm:$0x1] %vm75, %v74
    %s77 = scalar_lea.vmem %s0, 51
    %v78 = vld [vmem:[%s77] sm:$0x1]
    %79 = vrot.lane.b32.xlu0 %v78, 102
    %v80 = vpop.permute.xlu0 %79
    %vm81 = vcmask 851760
    %82 = vst.msk [vmem:[#allocation0] sm:$0x1] %vm81, %v80
    %s83 = scalar_lea.vmem %s0, 50
    %v84 = vld [vmem:[%s83] sm:$0x1]
    %85 = vrot.lane.b32.xlu0 %v84, 100
    %v86 = vpop.permute.xlu0 %85
    %vm87 = vcmask 835360
    %88 = vst.msk [vmem:[#allocation0] sm:$0x1] %vm87, %v86
    %s89 = scalar_lea.vmem %s0, 49
    %v90 = vld [vmem:[%s89] sm:$0x1]
    %91 = vrot.lane.b32.xlu0 %v90, 98
    %v92 = vpop.permute.xlu0 %91
    %vm93 = vcmask 818960
    %94 = vst.msk [vmem:[#allocation0] sm:$0x1] %vm93, %v92
    %s95 = scalar_lea.vmem %s0, 48
    %v96 = vld [vmem:[%s95] sm:$0x1]
    %97 = vrot.lane.b32.xlu0 %v96, 96
    %v98 = vpop.permute.xlu0 %97
    %vm99 = vcmask 802560
    %100 = vst.msk [vmem:[#allocation0] sm:$0x1] %vm99, %v98
    %s101 = scalar_lea.vmem %s0, 47
    %v102 = vld [vmem:[%s101] sm:$0x1]
    %103 = vrot.lane.b32.xlu0 %v102, 94
    %v104 = vpop.permute.xlu0 %103
    %vm105 = vcmask 786160
    %106 = vst.msk [vmem:[#allocation0] sm:$0x1] %vm105, %v104
    %s107 = scalar_lea.vmem %s0, 46
    %v108 = vld [vmem:[%s107] sm:$0x1]
    %109 = vrot.lane.b32.xlu0 %v108, 92
    %v110 = vpop.permute.xlu0 %109
    %vm111 = vcmask 769760
    %112 = vst.msk [vmem:[#allocation0] sm:$0x1] %vm111, %v110
    %s113 = scalar_lea.vmem %s0, 45
    %v114 = vld [vmem:[%s113] sm:$0x1]
    %115 = vrot.lane.b32.xlu0 %v114, 90
    %v116 = vpop.permute.xlu0 %115
    %vm117 = vcmask 753360
    %118 = vst.msk [vmem:[#allocation0] sm:$0x1] %vm117, %v116
    %s119 = scalar_lea.vmem %s0, 44
    %v120 = vld [vmem:[%s119] sm:$0x1]
    %121 = vrot.lane.b32.xlu0 %v120, 88
    %v122 = vpop.permute.xlu0 %121
    %vm123 = vcmask 736960
    %124 = vst.msk [vmem:[#allocation0] sm:$0x1] %vm123, %v122
    %s125 = scalar_lea.vmem %s0, 43
    %v126 = vld [vmem:[%s125] sm:$0x1]
    %127 = vrot.lane.b32.xlu0 %v126, 86
    %v128 = vpop.permute.xlu0 %127
    %vm129 = vcmask 720560
    %130 = vst.msk [vmem:[#allocation0] sm:$0x1] %vm129, %v128
    %s131 = scalar_lea.vmem %s0, 42
    %v132 = vld [vmem:[%s131] sm:$0x1]
    %133 = vrot.lane.b32.xlu0 %v132, 84
    %v134 = vpop.permute.xlu0 %133
    %vm135 = vcmask 704160
    %136 = vst.msk [vmem:[#allocation0] sm:$0x1] %vm135, %v134
    %s137 = scalar_lea.vmem %s0, 41
    %v138 = vld [vmem:[%s137] sm:$0x1]
    %139 = vrot.lane.b32.xlu0 %v138, 82
    %v140 = vpop.permute.xlu0 %139
    %vm141 = vcmask 687760
    %142 = vst.msk [vmem:[#allocation0] sm:$0x1] %vm141, %v140
    %s143 = scalar_lea.vmem %s0, 40
    %v144 = vld [vmem:[%s143] sm:$0x1]
    %145 = vrot.lane.b32.xlu0 %v144, 80
    %v146 = vpop.permute.xlu0 %145
    %vm147 = vcmask 671360
    %148 = vst.msk [vmem:[#allocation0] sm:$0x1] %vm147, %v146
    %s149 = scalar_lea.vmem %s0, 39
    %v150 = vld [vmem:[%s149] sm:$0x1]
    %151 = vrot.lane.b32.xlu0 %v150, 78
    %v152 = vpop.permute.xlu0 %151
    %vm153 = vcmask 654960
    %154 = vst.msk [vmem:[#allocation0] sm:$0x1] %vm153, %v152
    %s155 = scalar_lea.vmem %s0, 38
    %v156 = vld [vmem:[%s155] sm:$0x1]
    %157 = vrot.lane.b32.xlu0 %v156, 76
    %v158 = vpop.permute.xlu0 %157
    %vm159 = vcmask 638560
    %160 = vst.msk [vmem:[#allocation0] sm:$0x1] %vm159, %v158
    %s161 = scalar_lea.vmem %s0, 37
    %v162 = vld [vmem:[%s161] sm:$0x1]
    %163 = vrot.lane.b32.xlu0 %v162, 74
    %v164 = vpop.permute.xlu0 %163
    %vm165 = vcmask 622160
    %166 = vst.msk [vmem:[#allocation0] sm:$0x1] %vm165, %v164
    %s167 = scalar_lea.vmem %s0, 36
    %v168 = vld [vmem:[%s167] sm:$0x1]
    %169 = vrot.lane.b32.xlu0 %v168, 72
    %v170 = vpop.permute.xlu0 %169
    %vm171 = vcmask 605760
    %172 = vst.msk [vmem:[#allocation0] sm:$0x1] %vm171, %v170
    %s173 = scalar_lea.vmem %s0, 35
    %v174 = vld [vmem:[%s173] sm:$0x1]
    %175 = vrot.lane.b32.xlu0 %v174, 70
    %v176 = vpop.permute.xlu0 %175
    %vm177 = vcmask 589360
    %178 = vst.msk [vmem:[#allocation0] sm:$0x1] %vm177, %v176
    %s179 = scalar_lea.vmem %s0, 34
    %v180 = vld [vmem:[%s179] sm:$0x1]
    %181 = vrot.lane.b32.xlu0 %v180, 68
    %v182 = vpop.permute.xlu0 %181
    %vm183 = vcmask 572960
    %184 = vst.msk [vmem:[#allocation0] sm:$0x1] %vm183, %v182
    %s185 = scalar_lea.vmem %s0, 33
    %v186 = vld [vmem:[%s185] sm:$0x1]
    %187 = vrot.lane.b32.xlu0 %v186, 66
    %v188 = vpop.permute.xlu0 %187
    %vm189 = vcmask 556560
    %190 = vst.msk [vmem:[#allocation0] sm:$0x1] %vm189, %v188
    %s191 = scalar_lea.vmem %s0, 32
    %v192 = vld [vmem:[%s191] sm:$0x1]
    %193 = vrot.lane.b32.xlu0 %v192, 64
    %v194 = vpop.permute.xlu0 %193
    %vm195 = vcmask 540160
    %196 = vst.msk [vmem:[#allocation0] sm:$0x1] %vm195, %v194
    %s197 = scalar_lea.vmem %s0, 31
    %v198 = vld [vmem:[%s197] sm:$0x1]
    %199 = vrot.lane.b32.xlu0 %v198, 62
    %v200 = vpop.permute.xlu0 %199
    %vm201 = vcmask 523760
    %202 = vst.msk [vmem:[#allocation0] sm:$0x1] %vm201, %v200
    %s203 = scalar_lea.vmem %s0, 30
    %v204 = vld [vmem:[%s203] sm:$0x1]
    %205 = vrot.lane.b32.xlu0 %v204, 60
    %v206 = vpop.permute.xlu0 %205
    %vm207 = vcmask 507360
    %208 = vst.msk [vmem:[#allocation0] sm:$0x1] %vm207, %v206
    %s209 = scalar_lea.vmem %s0, 29
    %v210 = vld [vmem:[%s209] sm:$0x1]
    %211 = vrot.lane.b32.xlu0 %v210, 58
    %v212 = vpop.permute.xlu0 %211
    %vm213 = vcmask 490960
    %214 = vst.msk [vmem:[#allocation0] sm:$0x1] %vm213, %v212
    %s215 = scalar_lea.vmem %s0, 28
    %v216 = vld [vmem:[%s215] sm:$0x1]
    %217 = vrot.lane.b32.xlu0 %v216, 56
    %v218 = vpop.permute.xlu0 %217
    %vm219 = vcmask 474560
    %220 = vst.msk [vmem:[#allocation0] sm:$0x1] %vm219, %v218
    %s221 = scalar_lea.vmem %s0, 27
    %v222 = vld [vmem:[%s221] sm:$0x1]
    %223 = vrot.lane.b32.xlu0 %v222, 54
    %v224 = vpop.permute.xlu0 %223
    %vm225 = vcmask 458160
    %226 = vst.msk [vmem:[#allocation0] sm:$0x1] %vm225, %v224
    %s227 = scalar_lea.vmem %s0, 26
    %v228 = vld [vmem:[%s227] sm:$0x1]
    %229 = vrot.lane.b32.xlu0 %v228, 52
    %v230 = vpop.permute.xlu0 %229
    %vm231 = vcmask 441760
    %232 = vst.msk [vmem:[#allocation0] sm:$0x1] %vm231, %v230
    %s233 = scalar_lea.vmem %s0, 25
    %v234 = vld [vmem:[%s233] sm:$0x1]
    %235 = vrot.lane.b32.xlu0 %v234, 50
    %v236 = vpop.permute.xlu0 %235
    %vm237 = vcmask 425360
    %238 = vst.msk [vmem:[#allocation0] sm:$0x1] %vm237, %v236
    %s239 = scalar_lea.vmem %s0, 24
    %v240 = vld [vmem:[%s239] sm:$0x1]
    %241 = vrot.lane.b32.xlu0 %v240, 48
    %v242 = vpop.permute.xlu0 %241
    %vm243 = vcmask 408960
    %244 = vst.msk [vmem:[#allocation0] sm:$0x1] %vm243, %v242
    %s245 = scalar_lea.vmem %s0, 23
    %v246 = vld [vmem:[%s245] sm:$0x1]
    %247 = vrot.lane.b32.xlu0 %v246, 46
    %v248 = vpop.permute.xlu0 %247
    %vm249 = vcmask 392560
    %250 = vst.msk [vmem:[#allocation0] sm:$0x1] %vm249, %v248
    %s251 = scalar_lea.vmem %s0, 22
    %v252 = vld [vmem:[%s251] sm:$0x1]
    %253 = vrot.lane.b32.xlu0 %v252, 44
    %v254 = vpop.permute.xlu0 %253
    %vm255 = vcmask 376160
    %256 = vst.msk [vmem:[#allocation0] sm:$0x1] %vm255, %v254
    %s257 = scalar_lea.vmem %s0, 21
    %v258 = vld [vmem:[%s257] sm:$0x1]
    %259 = vrot.lane.b32.xlu0 %v258, 42
    %v260 = vpop.permute.xlu0 %259
    %vm261 = vcmask 359760
    %262 = vst.msk [vmem:[#allocation0] sm:$0x1] %vm261, %v260
    %s263 = scalar_lea.vmem %s0, 20
    %v264 = vld [vmem:[%s263] sm:$0x1]
    %265 = vrot.lane.b32.xlu0 %v264, 40
    %v266 = vpop.permute.xlu0 %265
    %vm267 = vcmask 343360
    %268 = vst.msk [vmem:[#allocation0] sm:$0x1] %vm267, %v266
    %s269 = scalar_lea.vmem %s0, 19
    %v270 = vld [vmem:[%s269] sm:$0x1]
    %271 = vrot.lane.b32.xlu0 %v270, 38
    %v272 = vpop.permute.xlu0 %271
    %vm273 = vcmask 326960
    %274 = vst.msk [vmem:[#allocation0] sm:$0x1] %vm273, %v272
    %s275 = scalar_lea.vmem %s0, 18
    %v276 = vld [vmem:[%s275] sm:$0x1]
    %277 = vrot.lane.b32.xlu0 %v276, 36
    %v278 = vpop.permute.xlu0 %277
    %vm279 = vcmask 310560
    %280 = vst.msk [vmem:[#allocation0] sm:$0x1] %vm279, %v278
    %s281 = scalar_lea.vmem %s0, 17
    %v282 = vld [vmem:[%s281] sm:$0x1]
    %283 = vrot.lane.b32.xlu0 %v282, 34
    %v284 = vpop.permute.xlu0 %283
    %vm285 = vcmask 294160
    %286 = vst.msk [vmem:[#allocation0] sm:$0x1] %vm285, %v284
    %s287 = scalar_lea.vmem %s0, 16
    %v288 = vld [vmem:[%s287] sm:$0x1]
    %289 = vrot.lane.b32.xlu0 %v288, 32
    %v290 = vpop.permute.xlu0 %289
    %vm291 = vcmask 277760
    %292 = vst.msk [vmem:[#allocation0] sm:$0x1] %vm291, %v290
    %s293 = scalar_lea.vmem %s0, 15
    %v294 = vld [vmem:[%s293] sm:$0x1]
    %295 = vrot.lane.b32.xlu0 %v294, 30
    %v296 = vpop.permute.xlu0 %295
    %vm297 = vcmask 261360
    %298 = vst.msk [vmem:[#allocation0] sm:$0x1] %vm297, %v296
    %s299 = scalar_lea.vmem %s0, 14
    %v300 = vld [vmem:[%s299] sm:$0x1]
    %301 = vrot.lane.b32.xlu0 %v300, 28
    %v302 = vpop.permute.xlu0 %301
    %vm303 = vcmask 244960
    %304 = vst.msk [vmem:[#allocation0] sm:$0x1] %vm303, %v302
    %s305 = scalar_lea.vmem %s0, 13
    %v306 = vld [vmem:[%s305] sm:$0x1]
    %307 = vrot.lane.b32.xlu0 %v306, 26
    %v308 = vpop.permute.xlu0 %307
    %vm309 = vcmask 228560
    %310 = vst.msk [vmem:[#allocation0] sm:$0x1] %vm309, %v308
    %s311 = scalar_lea.vmem %s0, 12
    %v312 = vld [vmem:[%s311] sm:$0x1]
    %313 = vrot.lane.b32.xlu0 %v312, 24
    %v314 = vpop.permute.xlu0 %313
    %vm315 = vcmask 212160
    %316 = vst.msk [vmem:[#allocation0] sm:$0x1] %vm315, %v314
    %s317 = scalar_lea.vmem %s0, 11
    %v318 = vld [vmem:[%s317] sm:$0x1]
    %319 = vrot.lane.b32.xlu0 %v318, 22
    %v320 = vpop.permute.xlu0 %319
    %vm321 = vcmask 195760
    %322 = vst.msk [vmem:[#allocation0] sm:$0x1] %vm321, %v320
    %s323 = scalar_lea.vmem %s0, 10
    %v324 = vld [vmem:[%s323] sm:$0x1]
    %325 = vrot.lane.b32.xlu0 %v324, 20
    %v326 = vpop.permute.xlu0 %325
    %vm327 = vcmask 179360
    %328 = vst.msk [vmem:[#allocation0] sm:$0x1] %vm327, %v326
    %s329 = scalar_lea.vmem %s0, 9
    %v330 = vld [vmem:[%s329] sm:$0x1]
    %331 = vrot.lane.b32.xlu0 %v330, 18
    %v332 = vpop.permute.xlu0 %331
    %vm333 = vcmask 162960
    %334 = vst.msk [vmem:[#allocation0] sm:$0x1] %vm333, %v332
    %s335 = scalar_lea.vmem %s0, 8
    %v336 = vld [vmem:[%s335] sm:$0x1]
    %337 = vrot.lane.b32.xlu0 %v336, 16
    %v338 = vpop.permute.xlu0 %337
    %vm339 = vcmask 146560
    %340 = vst.msk [vmem:[#allocation0] sm:$0x1] %vm339, %v338
    %s341 = scalar_lea.vmem %s0, 7
    %v342 = vld [vmem:[%s341] sm:$0x1]
    %343 = vrot.lane.b32.xlu0 %v342, 14
    %v344 = vpop.permute.xlu0 %343
    %vm345 = vcmask 130160
    %346 = vst.msk [vmem:[#allocation0] sm:$0x1] %vm345, %v344
    %s347 = scalar_lea.vmem %s0, 6
    %v348 = vld [vmem:[%s347] sm:$0x1]
    %349 = vrot.lane.b32.xlu0 %v348, 12
    %v350 = vpop.permute.xlu0 %349
    %vm351 = vcmask 113760
    %352 = vst.msk [vmem:[#allocation0] sm:$0x1] %vm351, %v350
    %s353 = scalar_lea.vmem %s0, 5
    %v354 = vld [vmem:[%s353] sm:$0x1]
    %355 = vrot.lane.b32.xlu0 %v354, 10
    %v356 = vpop.permute.xlu0 %355
    %vm357 = vcmask 97360
    %358 = vst.msk [vmem:[#allocation0] sm:$0x1] %vm357, %v356
    %s359 = scalar_lea.vmem %s0, 4
    %v360 = vld [vmem:[%s359] sm:$0x1]
    %361 = vrot.lane.b32.xlu0 %v360, 8
    %v362 = vpop.permute.xlu0 %361
    %vm363 = vcmask 80960
    %364 = vst.msk [vmem:[#allocation0] sm:$0x1] %vm363, %v362
    %s365 = scalar_lea.vmem %s0, 3
    %v366 = vld [vmem:[%s365] sm:$0x1]
    %367 = vrot.lane.b32.xlu0 %v366, 6
    %v368 = vpop.permute.xlu0 %367
    %vm369 = vcmask 64560
    %370 = vst.msk [vmem:[#allocation0] sm:$0x1] %vm369, %v368
    %s371 = scalar_lea.vmem %s0, 2
    %v372 = vld [vmem:[%s371] sm:$0x1]
    %373 = vrot.lane.b32.xlu0 %v372, 4
    %v374 = vpop.permute.xlu0 %373
    %vm375 = vcmask 48160
    %376 = vst.msk [vmem:[#allocation0] sm:$0x1] %vm375, %v374
    %s377 = scalar_lea.vmem %s0, 1
    %v378 = vld [vmem:[%s377] sm:$0x1]
    %379 = vrot.lane.b32.xlu0 %v378, 2
    %v380 = vpop.permute.xlu0 %379
    %vm381 = vcmask 31760
    %382 = vst.msk [vmem:[#allocation0] sm:$0x1] %vm381, %v380
    %s384 = sshllo.u32 0, 1
    %v386 = vld [vmem:[#allocation0] sm:%s384]
    %s387 = sshllo.u32 0, 1
    %388 = vst [vmem:[%s1] sm:%s387] %v386

// kernel: net_forward.1
$region0: #{net_forward.1}
  #allocation0 [shape = 'u32[]', space=smem, size = 0x4, offset = 0x4, fixed_abs, tag = 'smem constant byte address 0x4 - core index']
  #allocation1 [shape = 'u32[144,128]{1,0:T(1,128)}', space=vmem, size = 0x12000, scoped, tag = 'internal scratch']
  %s0 = inlined_call_operand.vmem [shape: f32[8,256], index: 0, kind: input, shape index: {}]
  %s1 = inlined_call_operand.vmem [shape: f32[256,320], index: 1, kind: input, shape index: {}]
  %s2 = inlined_call_operand.vmem [shape: f32[1,320], index: 2, kind: input, shape index: {}]
  %s3 = inlined_call_operand.vmem [shape: f32[320,128], index: 3, kind: input, shape index: {}]
  %s4 = inlined_call_operand.vmem [shape: f32[1,128], index: 4, kind: input, shape index: {}]
  %s5 = inlined_call_operand.vmem [shape: f32[8,128], index: 5, kind: output, shape index: {}]
  %s6 = sld [smem:[#allocation0]]
  $region30: #{net_forward.1} parent=0
    _
  %s8 = ssub.s32 1, %s6
  %s9 = scalar_select 0, %s8, %s6
  // Predicated region
  $region2: #{net_forward.1} parent=0 // pred_check
    _
  $region3: #{net_forward.1} parent=0 // pred_check_branch
    %11 = sbr.rel (0) target = $region5
  $region4: #{net_forward.1} parent=0 // pred_region
    _
  $region5: #{net_forward.1} parent=0 // pred_fallthru
    _
  // Predicated region
  $region6: #{net_forward.1} parent=0 // pred_check
    _
  $region7: #{net_forward.1} parent=0 // pred_check_branch
    %13 = sbr.rel (0) target = $region9
  $region8: #{net_forward.1} parent=0 // pred_region
    _
  $region9: #{net_forward.1} parent=0 // pred_fallthru
    _
  // Predicated region
  $region10: #{net_forward.1} parent=0 // pred_check
    _
  $region11: #{net_forward.1} parent=0 // pred_check_branch
    %15 = sbr.rel (0) target = $region13
  $region12: #{net_forward.1} parent=0 // pred_region
    _
  $region13: #{net_forward.1} parent=0 // pred_fallthru
    _
  // Predicated region
  $region14: #{net_forward.1} parent=0 // pred_check
    _
  $region15: #{net_forward.1} parent=0 // pred_check_branch
    %17 = sbr.rel (0) target = $region17
  $region16: #{net_forward.1} parent=0 // pred_region
    _
  $region17: #{net_forward.1} parent=0 // pred_fallthru
    _
  // Predicated region
  $region18: #{net_forward.1} parent=0 // pred_check
    _
  $region19: #{net_forward.1} parent=0 // pred_check_branch
    %19 = sbr.rel (0) target = $region21
  $region20: #{net_forward.1} parent=0 // pred_region
    _
  $region21: #{net_forward.1} parent=0 // pred_fallthru
    _
  %v20 = vld [vmem:[%s0] sm:$0xff]
  %v21 = vld [vmem:[%s0 + $0x8] sm:$0xff]
  %v22 = vld [vmem:[%s1] sm:$0xff]
  %v23 = vld [vmem:[%s1 + $0x8] sm:$0xff]
  %v24 = vld [vmem:[%s1 + $0x10] sm:$0xff]
  %v25 = vld [vmem:[%s1 + $0x18] sm:$0xff]
  %v26 = vld [vmem:[%s1 + $0x20] sm:$0xff]
  %v27 = vld [vmem:[%s1 + $0x28] sm:$0xff]
  %v28 = vld [vmem:[%s1 + $0x30] sm:$0xff]
  %v29 = vld [vmem:[%s1 + $0x38] sm:$0xff]
  %v30 = vld [vmem:[%s1 + $0x40] sm:$0xff]
  %v31 = vld [vmem:[%s1 + $0x48] sm:$0xff]
  %v32 = vld [vmem:[%s1 + $0x50] sm:$0xff]
  %v33 = vld [vmem:[%s1 + $0x58] sm:$0xff]
  %v34 = vld [vmem:[%s1 + $0x60] sm:$0xff]
  %v35 = vld [vmem:[%s1 + $0x68] sm:$0xff]
  %v36 = vld [vmem:[%s1 + $0x70] sm:$0xff]
  %v37 = vld [vmem:[%s1 + $0x78] sm:$0xff]
  %v38 = vld [vmem:[%s1 + $0x80] sm:$0xff]
  %v39 = vld [vmem:[%s1 + $0x88] sm:$0xff]
  %v40 = vld [vmem:[%s1 + $0x90] sm:$0xff]
  %v41 = vld [vmem:[%s1 + $0x98] sm:$0xff]
  %v42 = vld [vmem:[%s1 + $0xa0] sm:$0xff]
  %v43 = vld [vmem:[%s1 + $0xa8] sm:$0xff]
  %v44 = vld [vmem:[%s1 + $0xb0] sm:$0xff]
  %v45 = vld [vmem:[%s1 + $0xb8] sm:$0xff]
  %v46 = vld [vmem:[%s1 + $0xc0] sm:$0xff]
  %v47 = vld [vmem:[%s1 + $0xc8] sm:$0xff]
  %v48 = vld [vmem:[%s1 + $0xd0] sm:$0xff]
  %v49 = vld [vmem:[%s1 + $0xd8] sm:$0xff]
  %v50 = vld [vmem:[%s1 + $0xe0] sm:$0xff]
  %v51 = vld [vmem:[%s1 + $0xe8] sm:$0xff]
  %v52 = vld [vmem:[%s1 + $0xf0] sm:$0xff]
  %v53 = vld [vmem:[%s1 + $0xf8] sm:$0xff]
  %v54 = vld [vmem:[%s1 + $0x100] sm:$0xff]
  %v55 = vld [vmem:[%s1 + $0x108] sm:$0xff]
  %v56 = vld [vmem:[%s1 + $0x110] sm:$0xff]
  %v57 = vld [vmem:[%s1 + $0x118] sm:$0xff]
  %v58 = vld [vmem:[%s1 + $0x120] sm:$0xff]
  %v59 = vld [vmem:[%s1 + $0x128] sm:$0xff]
  %v60 = vld [vmem:[%s1 + $0x130] sm:$0xff]
  %v61 = vld [vmem:[%s1 + $0x138] sm:$0xff]
  %v62 = vld [vmem:[%s1 + $0x140] sm:$0xff]
  %v63 = vld [vmem:[%s1 + $0x148] sm:$0xff]
  %v64 = vld [vmem:[%s1 + $0x150] sm:$0xff]
  %v65 = vld [vmem:[%s1 + $0x158] sm:$0xff]
  %v66 = vld [vmem:[%s1 + $0x160] sm:$0xff]
  %v67 = vld [vmem:[%s1 + $0x168] sm:$0xff]
  %v68 = vld [vmem:[%s1 + $0x170] sm:$0xff]
  %v69 = vld [vmem:[%s1 + $0x178] sm:$0xff]
  %v70 = vld [vmem:[%s1 + $0x180] sm:$0xff]
  %v71 = vld [vmem:[%s1 + $0x188] sm:$0xff]
  %v72 = vld [vmem:[%s1 + $0x190] sm:$0xff]
  %v73 = vld [vmem:[%s1 + $0x198] sm:$0xff]
  %v74 = vld [vmem:[%s1 + $0x1a0] sm:$0xff]
  %v75 = vld [vmem:[%s1 + $0x1a8] sm:$0xff]
  %v76 = vld [vmem:[%s1 + $0x1b0] sm:$0xff]
  %v77 = vld [vmem:[%s1 + $0x1b8] sm:$0xff]
  %v78 = vld [vmem:[%s1 + $0x1c0] sm:$0xff]
  %v79 = vld [vmem:[%s1 + $0x1c8] sm:$0xff]
  %v80 = vld [vmem:[%s1 + $0x1d0] sm:$0xff]
  %v81 = vld [vmem:[%s1 + $0x1d8] sm:$0xff]
  %v82 = vld [vmem:[%s1 + $0x1e0] sm:$0xff]
  %v83 = vld [vmem:[%s1 + $0x1e8] sm:$0xff]
  %v84 = vld [vmem:[%s1 + $0x1f0] sm:$0xff]
  %v85 = vld [vmem:[%s1 + $0x1f8] sm:$0xff]
  %v86 = vld [vmem:[%s1 + $0x200] sm:$0xff]
  %v87 = vld [vmem:[%s1 + $0x208] sm:$0xff]
  %v88 = vld [vmem:[%s1 + $0x210] sm:$0xff]
  %v89 = vld [vmem:[%s1 + $0x218] sm:$0xff]
  %v90 = vld [vmem:[%s1 + $0x220] sm:$0xff]
  %v91 = vld [vmem:[%s1 + $0x228] sm:$0xff]
  %v92 = vld [vmem:[%s1 + $0x230] sm:$0xff]
  %v93 = vld [vmem:[%s1 + $0x238] sm:$0xff]
  %v94 = vld [vmem:[%s1 + $0x240] sm:$0xff]
  %v95 = vld [vmem:[%s1 + $0x248] sm:$0xff]
  %v96 = vld [vmem:[%s1 + $0x250] sm:$0xff]
  %v97 = vld [vmem:[%s1 + $0x258] sm:$0xff]
  %v98 = vld [vmem:[%s1 + $0x260] sm:$0xff]
  %v99 = vld [vmem:[%s1 + $0x268] sm:$0xff]
  %v100 = vld [vmem:[%s1 + $0x270] sm:$0xff]
  %v101 = vld [vmem:[%s1 + $0x278] sm:$0xff]
  %v102 = vld [vmem:[%s1 + $0x280] sm:$0xff]
  %v103 = vld [vmem:[%s1 + $0x288] sm:$0xff]
  %v104 = vld [vmem:[%s1 + $0x290] sm:$0xff]
  %v105 = vld [vmem:[%s1 + $0x298] sm:$0xff]
  %v106 = vld [vmem:[%s1 + $0x2a0] sm:$0xff]
  %v107 = vld [vmem:[%s1 + $0x2a8] sm:$0xff]
  %v108 = vld [vmem:[%s1 + $0x2b0] sm:$0xff]
  %v109 = vld [vmem:[%s1 + $0x2b8] sm:$0xff]
  %v110 = vld [vmem:[%s1 + $0x2c0] sm:$0xff]
  %v111 = vld [vmem:[%s1 + $0x2c8] sm:$0xff]
  %v112 = vld [vmem:[%s1 + $0x2d0] sm:$0xff]
  %v113 = vld [vmem:[%s1 + $0x2d8] sm:$0xff]
  %v114 = vld [vmem:[%s1 + $0x2e0] sm:$0xff]
  %v115 = vld [vmem:[%s1 + $0x2e8] sm:$0xff]
  %v116 = vld [vmem:[%s1 + $0x2f0] sm:$0xff]
  %v117 = vld [vmem:[%s1 + $0x2f8] sm:$0xff]
  %v118 = vld [vmem:[%s2] sm:$0x7]
  %v120 = vlaneseq
  %v121 = vshrl.u32 %v120, 7
  %v122 = vsub.s32 0, %v121
  %v123 = vrot.slane %v118, %v122
  %v124 = vlaneseq
  %v125 = vshrl.u32 %v124, 7
  %v126 = vsub.s32 1, %v125
  %v127 = vrot.slane %v118, %v126
  %v128 = vlaneseq
  %v129 = vshrl.u32 %v128, 7
  %v130 = vsub.s32 2, %v129
  %v131 = vrot.slane %v118, %v130
  %135 = vmatprep.subr.mxu0 %v23
  %136 = vmatpush1.msra.mxu0 %v22
  %137 = vmatprep.subr.mxu0 %v26
  %138 = vmatpush1.msra.mxu0 %v25
  %139 = vmatprep.subr.mxu0 %v29
  %140 = vmatpush1.msra.mxu0 %v28
  %141 = vmatprep.subr.mxu0 %v32
  %142 = vmatpush1.msra.mxu0 %v31
  %143 = vmatprep.subr.mxu0 %v35
  %144 = vmatpush1.msra.mxu0 %v34
  %145 = vmatprep.subr.mxu0 %v38
  %146 = vmatpush1.msra.mxu0 %v37
  %147 = vmatprep.subr.mxu0 %v41
  %148 = vmatpush1.msra.mxu0 %v40
  %149 = vmatprep.subr.mxu0 %v44
  %150 = vmatpush1.msra.mxu0 %v43
  %151 = vmatprep.subr.mxu0 %v47
  %152 = vmatpush1.msra.mxu0 %v46
  %153 = vmatprep.subr.mxu0 %v50
  %154 = vmatpush1.msra.mxu0 %v49
  %155 = vmatprep.subr.mxu0 %v53
  %156 = vmatpush1.msra.mxu0 %v52
  %157 = vmatprep.subr.mxu0 %v56
  %158 = vmatpush1.msra.mxu0 %v55
  %159 = vmatprep.subr.mxu0 %v59
  %160 = vmatpush1.msra.mxu0 %v58
  %161 = vmatprep.subr.mxu0 %v62
  %162 = vmatpush1.msra.mxu0 %v61
  %163 = vmatprep.subr.mxu0 %v65
  %164 = vmatpush1.msra.mxu0 %v64
  %165 = vmatprep.subr.mxu0 %v68
  %166 = vmatpush1.msra.mxu0 %v67
  %167 = vmatprep.subr.mxu0 %v71
  %168 = vmatpush1.msra.mxu0 %v70
  %169 = vmatprep.subr.mxu0 %v74
  %170 = vmatpush1.msra.mxu0 %v73
  %171 = vmatprep.subr.mxu0 %v77
  %172 = vmatpush1.msra.mxu0 %v76
  %173 = vmatprep.subr.mxu0 %v80
  %174 = vmatpush1.msra.mxu0 %v79
  %175 = vmatprep.subr.mxu0 %v83
  %176 = vmatpush1.msra.mxu0 %v82
  %177 = vmatprep.subr.mxu0 %v86
  %178 = vmatpush1.msra.mxu0 %v85
  %179 = vmatprep.subr.mxu0 %v89
  %180 = vmatpush1.msra.mxu0 %v88
  %181 = vmatprep.subr.mxu0 %v92
  %182 = vmatpush1.msra.mxu0 %v91
  %183 = vmatprep.subr.mxu0 %v95
  %184 = vmatpush1.msra.mxu0 %v94
  %185 = vmatprep.subr.mxu0 %v98
  %186 = vmatpush1.msra.mxu0 %v97
  %187 = vmatprep.subr.mxu0 %v101
  %188 = vmatpush1.msra.mxu0 %v100
  %189 = vmatprep.subr.mxu0 %v104
  %190 = vmatpush1.msra.mxu0 %v103
  %191 = vmatprep.subr.mxu0 %v107
  %192 = vmatpush1.msra.mxu0 %v106
  %193 = vmatprep.subr.mxu0 %v110
  %194 = vmatpush1.msra.mxu0 %v109
  %195 = vmatprep.subr.mxu0 %v113
  %196 = vmatpush1.msra.mxu0 %v112
  %197 = vmatprep.subr.mxu0 %v116
  %198 = vmatpush1.msra.mxu0 %v115
  %199 = vmatprep.mubr.f32.mxu0 %v21
  %200 = vmatmul.mubr.f32.gmra.mrb[0].mxu0 %v20
  %v201 = vpop.f32.mrb[0].mxu0
  %v202 = vadd.f32 %v123, %v201
  %v203 = vpop.f32.mrb[0].mxu0
  %v204 = vadd.f32 %v127, %v203
  %205 = vdwg.mxu0
  %206 = vmatprep.subr.mxu0 0.0
  %207 = vmatpush1.msra.mxu0 %v24
  %208 = vmatprep.subr.mxu0 0.0
  %209 = vmatpush1.msra.mxu0 %v27
  %210 = vmatprep.subr.mxu0 0.0
  %211 = vmatpush1.msra.mxu0 %v30
  %212 = vmatprep.subr.mxu0 0.0
  %213 = vmatpush1.msra.mxu0 %v33
  %214 = vmatprep.subr.mxu0 0.0
  %215 = vmatpush1.msra.mxu0 %v36
  %216 = vmatprep.subr.mxu0 0.0
  %217 = vmatpush1.msra.mxu0 %v39
  %218 = vmatprep.subr.mxu0 0.0
  %219 = vmatpush1.msra.mxu0 %v42
  %220 = vmatprep.subr.mxu0 0.0
  %221 = vmatpush1.msra.mxu0 %v45
  %222 = vmatprep.subr.mxu0 0.0
  %223 = vmatpush1.msra.mxu0 %v48
  %224 = vmatprep.subr.mxu0 0.0
  %225 = vmatpush1.msra.mxu0 %v51
  %226 = vmatprep.subr.mxu0 0.0
  %227 = vmatpush1.msra.mxu0 %v54
  %228 = vmatprep.subr.mxu0 0.0
  %229 = vmatpush1.msra.mxu0 %v57
  %230 = vmatprep.subr.mxu0 0.0
  %231 = vmatpush1.msra.mxu0 %v60
  %232 = vmatprep.subr.mxu0 0.0
  %233 = vmatpush1.msra.mxu0 %v63
  %234 = vmatprep.subr.mxu0 0.0
  %235 = vmatpush1.msra.mxu0 %v66
  %236 = vmatprep.subr.mxu0 0.0
  %237 = vmatpush1.msra.mxu0 %v69
  %238 = vmatprep.subr.mxu0 0.0
  %239 = vmatpush1.msra.mxu0 %v72
  %240 = vmatprep.subr.mxu0 0.0
  %241 = vmatpush1.msra.mxu0 %v75
  %242 = vmatprep.subr.mxu0 0.0
  %243 = vmatpush1.msra.mxu0 %v78
  %244 = vmatprep.subr.mxu0 0.0
  %245 = vmatpush1.msra.mxu0 %v81
  %246 = vmatprep.subr.mxu0 0.0
  %247 = vmatpush1.msra.mxu0 %v84
  %248 = vmatprep.subr.mxu0 0.0
  %249 = vmatpush1.msra.mxu0 %v87
  %250 = vmatprep.subr.mxu0 0.0
  %251 = vmatpush1.msra.mxu0 %v90
  %252 = vmatprep.subr.mxu0 0.0
  %253 = vmatpush1.msra.mxu0 %v93
  %254 = vmatprep.subr.mxu0 0.0
  %255 = vmatpush1.msra.mxu0 %v96
  %256 = vmatprep.subr.mxu0 0.0
  %257 = vmatpush1.msra.mxu0 %v99
  %258 = vmatprep.subr.mxu0 0.0
  %259 = vmatpush1.msra.mxu0 %v102
  %260 = vmatprep.subr.mxu0 0.0
  %261 = vmatpush1.msra.mxu0 %v105
  %262 = vmatprep.subr.mxu0 0.0
  %263 = vmatpush1.msra.mxu0 %v108
  %264 = vmatprep.subr.mxu0 0.0
  %265 = vmatpush1.msra.mxu0 %v111
  %266 = vmatprep.subr.mxu0 0.0
  %267 = vmatpush1.msra.mxu0 %v114
  %268 = vmatprep.subr.mxu0 0.0
  %269 = vmatpush1.msra.mxu0 %v117
  %270 = vmatprep.mubr.f32.mxu0 %v21
  %271 = vmatmul.mubr.f32.gmra.mrb[0].mxu0 %v20
  %v272 = vpop.f32.mrb[0].mxu0
  %v273 = vadd.f32 %v131, %v272
  %v274 = vpop.f32.mrb[0].mxu0
  %275 = vdwg.mxu0
  %v276 = vmax.f32 %v202, 0.0
  %v277 = vmax.f32 %v204, 0.0
  %v278 = vmax.f32 %v273, 0.0
  %v279 = vld [vmem:[%s3] sm:$0xff]
  %v280 = vld [vmem:[%s3 + $0x8] sm:$0xff]
  %v281 = vld [vmem:[%s3 + $0x10] sm:$0xff]
  %v282 = vld [vmem:[%s3 + $0x18] sm:$0xff]
  %v283 = vld [vmem:[%s3 + $0x20] sm:$0xff]
  %v284 = vld [vmem:[%s3 + $0x28] sm:$0xff]
  %v285 = vld [vmem:[%s3 + $0x30] sm:$0xff]
  %v286 = vld [vmem:[%s3 + $0x38] sm:$0xff]
  %v287 = vld [vmem:[%s3 + $0x40] sm:$0xff]
  %v288 = vld [vmem:[%s3 + $0x48] sm:$0xff]
  %v289 = vld [vmem:[%s3 + $0x50] sm:$0xff]
  %v290 = vld [vmem:[%s3 + $0x58] sm:$0xff]
  %v291 = vld [vmem:[%s3 + $0x60] sm:$0xff]
  %v292 = vld [vmem:[%s3 + $0x68] sm:$0xff]
  %v293 = vld [vmem:[%s3 + $0x70] sm:$0xff]
  %v294 = vld [vmem:[%s3 + $0x78] sm:$0xff]
  %v295 = vld [vmem:[%s3 + $0x80] sm:$0xff]
  %v296 = vld [vmem:[%s3 + $0x88] sm:$0xff]
  %v297 = vld [vmem:[%s3 + $0x90] sm:$0xff]
  %v298 = vld [vmem:[%s3 + $0x98] sm:$0xff]
  %v299 = vld [vmem:[%s3 + $0xa0] sm:$0xff]
  %v300 = vld [vmem:[%s3 + $0xa8] sm:$0xff]
  %v301 = vld [vmem:[%s3 + $0xb0] sm:$0xff]
  %v302 = vld [vmem:[%s3 + $0xb8] sm:$0xff]
  %v303 = vld [vmem:[%s3 + $0xc0] sm:$0xff]
  %v304 = vld [vmem:[%s3 + $0xc8] sm:$0xff]
  %v305 = vld [vmem:[%s3 + $0xd0] sm:$0xff]
  %v306 = vld [vmem:[%s3 + $0xd8] sm:$0xff]
  %v307 = vld [vmem:[%s3 + $0xe0] sm:$0xff]
  %v308 = vld [vmem:[%s3 + $0xe8] sm:$0xff]
  %v309 = vld [vmem:[%s3 + $0xf0] sm:$0xff]
  %v310 = vld [vmem:[%s3 + $0xf8] sm:$0xff]
  %v311 = vld [vmem:[%s3 + $0x100] sm:$0xff]
  %v312 = vld [vmem:[%s3 + $0x108] sm:$0xff]
  %v313 = vld [vmem:[%s3 + $0x110] sm:$0xff]
  %v314 = vld [vmem:[%s3 + $0x118] sm:$0xff]
  %v315 = vld [vmem:[%s3 + $0x120] sm:$0xff]
  %v316 = vld [vmem:[%s3 + $0x128] sm:$0xff]
  %v317 = vld [vmem:[%s3 + $0x130] sm:$0xff]
  %v318 = vld [vmem:[%s3 + $0x138] sm:$0xff]
  %v319 = vld [vmem:[%s4] sm:$0x1]
  %v321 = vlaneseq
  %v322 = vshrl.u32 %v321, 7
  %v323 = vsub.s32 0, %v322
  %v324 = vrot.slane %v319, %v323
  %vm326 = vcmask 523264
  %v328 = vsel %vm326, %v278, 0
  %330 = vmatprep.subr.mxu0 0.0
  %331 = vmatpush1.msra.mxu0 %v279
  %332 = vmatprep.subr.mxu0 0.0
  %333 = vmatpush1.msra.mxu0 %v280
  %334 = vmatprep.subr.mxu0 0.0
  %335 = vmatpush1.msra.mxu0 %v281
  %336 = vmatprep.subr.mxu0 0.0
  %337 = vmatpush1.msra.mxu0 %v282
  %338 = vmatprep.subr.mxu0 0.0
  %339 = vmatpush1.msra.mxu0 %v283
  %340 = vmatprep.subr.mxu0 0.0
  %341 = vmatpush1.msra.mxu0 %v284
  %342 = vmatprep.subr.mxu0 0.0
  %343 = vmatpush1.msra.mxu0 %v285
  %344 = vmatprep.subr.mxu0 0.0
  %345 = vmatpush1.msra.mxu0 %v286
  %346 = vmatprep.subr.mxu0 0.0
  %347 = vmatpush1.msra.mxu0 %v287
  %348 = vmatprep.subr.mxu0 0.0
  %349 = vmatpush1.msra.mxu0 %v288
  %350 = vmatprep.subr.mxu0 0.0
  %351 = vmatpush1.msra.mxu0 %v289
  %352 = vmatprep.subr.mxu0 0.0
  %353 = vmatpush1.msra.mxu0 %v290
  %354 = vmatprep.subr.mxu0 0.0
  %355 = vmatpush1.msra.mxu0 %v291
  %356 = vmatprep.subr.mxu0 0.0
  %357 = vmatpush1.msra.mxu0 %v292
  %358 = vmatprep.subr.mxu0 0.0
  %359 = vmatpush1.msra.mxu0 %v293
  %360 = vmatprep.subr.mxu0 0.0
  %361 = vmatpush1.msra.mxu0 %v294
  %362 = vmatprep.subr.mxu0 0.0
  %363 = vmatpush1.msra.mxu0 %v295
  %364 = vmatprep.subr.mxu0 0.0
  %365 = vmatpush1.msra.mxu0 %v296
  %366 = vmatprep.subr.mxu0 0.0
  %367 = vmatpush1.msra.mxu0 %v297
  %368 = vmatprep.subr.mxu0 0.0
  %369 = vmatpush1.msra.mxu0 %v298
  %370 = vmatprep.subr.mxu0 0.0
  %371 = vmatpush1.msra.mxu0 %v299
  %372 = vmatprep.subr.mxu0 0.0
  %373 = vmatpush1.msra.mxu0 %v300
  %374 = vmatprep.subr.mxu0 0.0
  %375 = vmatpush1.msra.mxu0 %v301
  %376 = vmatprep.subr.mxu0 0.0
  %377 = vmatpush1.msra.mxu0 %v302
  %378 = vmatprep.subr.mxu0 0.0
  %379 = vmatpush1.msra.mxu0 %v303
  %380 = vmatprep.subr.mxu0 0.0
  %381 = vmatpush1.msra.mxu0 %v304
  %382 = vmatprep.subr.mxu0 0.0
  %383 = vmatpush1.msra.mxu0 %v305
  %384 = vmatprep.subr.mxu0 0.0
  %385 = vmatpush1.msra.mxu0 %v306
  %386 = vmatprep.subr.mxu0 0.0
  %387 = vmatpush1.msra.mxu0 %v307
  %388 = vmatprep.subr.mxu0 0.0
  %389 = vmatpush1.msra.mxu0 %v308
  %390 = vmatprep.subr.mxu0 0.0
  %391 = vmatpush1.msra.mxu0 %v309
  %392 = vmatprep.subr.mxu0 0.0
  %393 = vmatpush1.msra.mxu0 %v310
  %394 = vmatprep.mubr.f32.mxu0 %v277
  %395 = vmatmul.mubr.f32.gmra.mrb[0].mxu0 %v276
  %v396 = vpop.f32.mrb[0].mxu0
  %v397 = vadd.f32 %v324, %v396
  %v398 = vpop.f32.mrb[0].mxu0
  %399 = vdwg.mxu0
  %400 = vmatprep.subr.mxu0 0.0
  %401 = vmatpush1.msra.mxu0 %v311
  %402 = vmatprep.subr.mxu0 0.0
  %403 = vmatpush1.msra.mxu0 %v312
  %404 = vmatprep.subr.mxu0 0.0
  %405 = vmatpush1.msra.mxu0 %v313
  %406 = vmatprep.subr.mxu0 0.0
  %407 = vmatpush1.msra.mxu0 %v314
  %408 = vmatprep.subr.mxu0 0.0
  %409 = vmatpush1.msra.mxu0 %v315
  %410 = vmatprep.subr.mxu0 0.0
  %411 = vmatpush1.msra.mxu0 %v316
  %412 = vmatprep.subr.mxu0 0.0
  %413 = vmatpush1.msra.mxu0 %v317
  %414 = vmatprep.subr.mxu0 0.0
  %415 = vmatpush1.msra.mxu0 %v318
  %416 = vmatprep.subr.mxu0 0.0
  %417 = vmatpush1.msra.mxu0 0.0
  %418 = vmatprep.subr.mxu0 0.0
  %419 = vmatpush1.msra.mxu0 0.0
  %420 = vmatprep.subr.mxu0 0.0
  %421 = vmatpush1.msra.mxu0 0.0
  %422 = vmatprep.subr.mxu0 0.0
  %423 = vmatpush1.msra.mxu0 0.0
  %424 = vmatprep.subr.mxu0 0.0
  %425 = vmatpush1.msra.mxu0 0.0
  %426 = vmatprep.subr.mxu0 0.0
  %427 = vmatpush1.msra.mxu0 0.0
  %428 = vmatprep.subr.mxu0 0.0
  %429 = vmatpush1.msra.mxu0 0.0
  %430 = vmatprep.subr.mxu0 0.0
  %431 = vmatpush1.msra.mxu0 0.0
  %432 = vmatprep.subr.mxu0 0.0
  %433 = vmatpush1.msra.mxu0 0.0
  %434 = vmatprep.subr.mxu0 0.0
  %435 = vmatpush1.msra.mxu0 0.0
  %436 = vmatprep.subr.mxu0 0.0
  %437 = vmatpush1.msra.mxu0 0.0
  %438 = vmatprep.subr.mxu0 0.0
  %439 = vmatpush1.msra.mxu0 0.0
  %440 = vmatprep.subr.mxu0 0.0
  %441 = vmatpush1.msra.mxu0 0.0
  %442 = vmatprep.subr.mxu0 0.0
  %443 = vmatpush1.msra.mxu0 0.0
  %444 = vmatprep.subr.mxu0 0.0
  %445 = vmatpush1.msra.mxu0 0.0
  %446 = vmatprep.subr.mxu0 0.0
  %447 = vmatpush1.msra.mxu0 0.0
  %448 = vmatprep.subr.mxu0 0.0
  %449 = vmatpush1.msra.mxu0 0.0
  %450 = vmatprep.subr.mxu0 0.0
  %451 = vmatpush1.msra.mxu0 0.0
  %452 = vmatprep.subr.mxu0 0.0
  %453 = vmatpush1.msra.mxu0 0.0
  %454 = vmatprep.subr.mxu0 0.0
  %455 = vmatpush1.msra.mxu0 0.0
  %456 = vmatprep.subr.mxu0 0.0
  %457 = vmatpush1.msra.mxu0 0.0
  %458 = vmatprep.subr.mxu0 0.0
  %459 = vmatpush1.msra.mxu0 0.0
  %460 = vmatprep.subr.mxu0 0.0
  %461 = vmatpush1.msra.mxu0 0.0
  %462 = vmatprep.subr.mxu0 0.0
  %463 = vmatpush1.msra.mxu0 0.0
  %464 = vmatprep.mubr.f32.mxu0 0.0
  %465 = vmatmul.mubr.f32.gmra.mrb[0].mxu0 %v328
  %v466 = vpop.f32.mrb[0].mxu0
  %v467 = vadd.f32 %v397, %v466
  %v468 = vpop.f32.mrb[0].mxu0
  %469 = vdwg.mxu0
  %470 = vst [vmem:[%s5] sm:$0xff] %v467
  // Predicated region
  $region22: #{net_forward.1} parent=0 // pred_check
    _
  $region23: #{net_forward.1} parent=0 // pred_check_branch
    %472 = sbr.rel (0) target = $region25
  $region24: #{net_forward.1} parent=0 // pred_region
    _
  $region25: #{net_forward.1} parent=0 // pred_fallthru
    _
  // Predicated region
  $region26: #{net_forward.1} parent=0 // pred_check
    _
  $region27: #{net_forward.1} parent=0 // pred_check_branch
    %474 = sbr.rel (0) target = $region29
  $region28: #{net_forward.1} parent=0 // pred_region
    _
  $region29: #{net_forward.1} parent=0 // pred_fallthru
    _

</llo_original>
